<compile_context>
chip_gen: v6e
topology: v6e:2x2x1
jax: 0.10.0
libtpu: 0.0.40
codegen_flags: <defaults>
</compile_context>

<pallas_src>
import jax
import jax.numpy as jnp
from jax import lax
from jax.experimental import pallas as pl
from jax.experimental.pallas import tpu as pltpu


def _round_up(x, m):
    return (x + m - 1) // m * m


def _tensorcores_per_chip():
    """Best-effort TensorCores-per-chip detection (megacore v4/v5p, v7x)."""
    try:
        kind = jax.devices()[0].device_kind.lower()
    except Exception:
        return 1
    if any(s in kind for s in ("lite", "v2", "v3", "v5e", "v6e", "v6")):
        return 1
    if any(s in kind for s in ("v4", "v5p", "v5", "v7", "7x")):
        return 2
    return 1


def _pick_batch_tile(B, batch_tile, num_tc):
    """Lane-aligned batch tile; split across TCs only when it actually helps."""
    B128 = _round_up(B, 128)
    bt = max(128, min(_round_up(batch_tile, 128), B128))
    if num_tc >= 2:
        if bt == B128 and B128 >= 256:
            # Single big tile: halve so the second TensorCore gets work.
            bt = _round_up(B128 // 2, 128)
        else:
            nb = pl.cdiv(B, bt)
            if nb > 1 and nb % 2 == 1:
                # Prefer an even grid so both cores split the steps cleanly.
                cand = _round_up(pl.cdiv(B, nb + 1), 128)
                if cand >= 128 and pl.cdiv(B, cand) % 2 == 0:
                    bt = cand
    return bt


def ddpg_actor_kernel(x_ref, w1_ref, b1_ref, w2_ref, b2_ref, wo_ref, bo_ref,
                      out_ref):
    # x: [bt, n_state] natural layout (batch on sublanes, features on lanes).
    x = x_ref[...].astype(jnp.bfloat16)

    # Layer 1: contract feature axes (NT matmul) -> feature-major [hidden1, bt]
    # so the batch axis lands on lanes for everything downstream.
    h1 = lax.dot_general(w1_ref[...], x,
                         dimension_numbers=(((1,), (1,)), ((), ())),
                         preferred_element_type=jnp.float32)
    h1 = jnp.maximum(h1 + b1_ref[...], 0.0)            # f32 elementwise tail

    # Layer 2: [hidden2, hidden1] @ [hidden1, bt] -> [hidden2, bt], ReLU.
    h2 = jnp.dot(w2_ref[...], h1.astype(jnp.bfloat16),
                 preferred_element_type=jnp.float32)
    h2 = jnp.maximum(h2 + b2_ref[...], 0.0)

    # Layer 3 (hidden2 -> 1): VPU multiply + sublane reduction instead of an
    # N=1 MXU matmul, then Tanh.  Result is a lane-dense [1, bt] slab.
    q = jnp.sum(h2 * wo_ref[...], axis=0, keepdims=True) + bo_ref[...]
    out_ref[...] = jnp.tanh(q).astype(out_ref.dtype)


def ddpg_actor_forward(state, params, *, batch_tile=1024):
    """state: [B, n_state] -> action: [B, 1]"""
    B, n_state = state.shape
    w1, b1, w2, b2, wo, bo = params
    hidden1 = w1.shape[0]
    hidden2 = w2.shape[0]

    # bf16 MXU operands (accumulation stays f32 in-kernel); biases and the
    # output layer stay f32.  Weight casts are tiny (fused / constant-folded).
    w1 = w1.astype(jnp.bfloat16)
    w2 = w2.astype(jnp.bfloat16)

    num_tc = _tensorcores_per_chip()
    bt = _pick_batch_tile(B, batch_tile, num_tc)
    nb = pl.cdiv(B, bt)

    def batch_map(i):
        return (i, 0)

    def out_map(i):
        return (0, i)

    def rep_map(i):
        return (0, 0)

    # Grid-invariant weight/bias blocks (constant index_map -> fetched once).
    in_specs = [
        pl.BlockSpec((bt, n_state), batch_map),        # state (natural layout)
        pl.BlockSpec((hidden1, n_state), rep_map),     # w1
        pl.BlockSpec((hidden1, 1), rep_map),           # b1
        pl.BlockSpec((hidden2, hidden1), rep_map),     # w2
        pl.BlockSpec((hidden2, 1), rep_map),           # b2
        pl.BlockSpec((hidden2, 1), rep_map),           # wo
        pl.BlockSpec((1, 1), rep_map),                 # bo
    ]
    out_spec = pl.BlockSpec((1, bt), out_map)          # lane-dense store

    flops = 2 * B * (n_state * hidden1 + hidden1 * hidden2 + hidden2)
    bytes_accessed = (state.size * state.dtype.itemsize
                      + sum(int(a.size) * a.dtype.itemsize
                            for a in (w1, b1, w2, b2, wo, bo))
                      + B * 4)
    cost = pl.CostEstimate(flops=flops, transcendentals=B,
                           bytes_accessed=bytes_accessed)

    out = pl.pallas_call(
        ddpg_actor_kernel,
        out_shape=jax.ShapeDtypeStruct((1, nb * bt), jnp.float32),
        grid_spec=pl.GridSpec(
            grid=(nb,),
            in_specs=in_specs,
            out_specs=out_spec,
        ),
        compiler_params=pltpu.CompilerParams(
            dimension_semantics=("parallel",),
        ),
        cost_estimate=cost,
    )(state, w1, b1, w2, b2, wo, bo)

    # Garbage lanes from the ragged trailing block live only in columns >= B;
    # this slice discards them (keep exactly as-is).
    return out[0, :B][:, None]


def init_params(key, n_state, hidden1, hidden2):
    """PyTorch-Linear-style init (U[-1/sqrt(fan_in), +1/sqrt(fan_in)]).

    Kernel-friendly (feature-major) shapes:
      w1: (hidden1, n_state), b1: (hidden1, 1)
      w2: (hidden2, hidden1), b2: (hidden2, 1)
      wo: (hidden2, 1)       , bo: (1, 1)       # final Linear(hidden2, 1)
    """
    def linear(key, fan_in, fan_out):
        kw, kb = jax.random.split(key)
        bound = 1.0 / jnp.sqrt(fan_in)
        w = jax.random.uniform(kw, (fan_out, fan_in), jnp.float32, -bound, bound)
        b = jax.random.uniform(kb, (fan_out, 1), jnp.float32, -bound, bound)
        return w, b

    keys = jax.random.split(key, 3)
    w1, b1 = linear(keys[0], n_state, hidden1)
    w2, b2 = linear(keys[1], hidden1, hidden2)
    w3, b3 = linear(keys[2], hidden2, 1)          # (1, hidden2), (1, 1)
    wo = w3.T                                     # (hidden2, 1)
    bo = b3                                       # (1, 1)
    return (w1, b1, w2, b2, wo, bo)


def reference_forward(state, params):
    """Reference with the same bf16-operand / f32-accumulate matmul semantics."""
    w1, b1, w2, b2, wo, bo = params
    bf = jnp.bfloat16
    h1 = lax.dot_general(state.astype(bf), w1.astype(bf),
                         dimension_numbers=(((1,), (1,)), ((), ())),
                         preferred_element_type=jnp.float32)
    h1 = jnp.maximum(h1 + b1[:, 0][None, :], 0.0)
    h2 = lax.dot_general(h1.astype(bf), w2.astype(bf),
                         dimension_numbers=(((1,), (1,)), ((), ())),
                         preferred_element_type=jnp.float32)
    h2 = jnp.maximum(h2 + b2[:, 0][None, :], 0.0)
    q = jnp.sum(h2 * wo[:, 0][None, :], axis=1, keepdims=True) + bo[0, 0]
    return jnp.tanh(q)


if __name__ == "__main__":
    n_state = 16
    hidden1, hidden2 = 32, 32
    batch = 64

    key = jax.random.PRNGKey(0)
    k_x, k_p = jax.random.split(key)
    state = jax.random.normal(k_x, (batch, n_state), jnp.float32)
    params = init_params(k_p, n_state, hidden1, hidden2)

    act = ddpg_actor_forward(state, params)
    act = jax.block_until_ready(act)

    act_ref = reference_forward(state, params)
    assert act.shape == (batch, 1)
    # Both sides use bf16 MXU operands with f32 accumulation; remaining delta
    # is accumulation-order / tanh-approximation noise.
    max_err = float(jnp.max(jnp.abs(act - act_ref)))
    assert jnp.allclose(act, act_ref, atol=1e-4, rtol=1e-4), (
        f"mismatch vs JAX reference (max abs err {max_err})")

    print("KERNEL_OK")
</pallas_src>

<mosaic_0001>
module attributes {stable_mosaic.version = 11 : i64} {
  func.func @ddpg_actor_kernel(%arg0: i32, %arg1: memref<128x16xf32, #tpu.memory_space<vmem>>, %arg2: memref<32x16xbf16, #tpu.memory_space<vmem>>, %arg3: memref<32x1xf32, #tpu.memory_space<vmem>>, %arg4: memref<32x32xbf16, #tpu.memory_space<vmem>>, %arg5: memref<32x1xf32, #tpu.memory_space<vmem>>, %arg6: memref<32x1xf32, #tpu.memory_space<vmem>>, %arg7: memref<1x1xf32, #tpu.memory_space<vmem>>, %arg8: memref<1x128xf32, #tpu.memory_space<vmem>>) attributes {dimension_semantics = [#tpu.dimension_semantics<parallel>], iteration_bounds = array<i64: 1>, scalar_prefetch = 0 : i64, scratch_operands = 0 : i64, tpu.core_type = #tpu.core_type<tc>, window_params = [{transform_indices = @transform_0, window_bounds = array<i64: 128, 16>}, {pipeline_mode = #tpu.pipeline_mode<synchronous>, transform_indices = @transform_1, window_bounds = array<i64: 32, 16>}, {pipeline_mode = #tpu.pipeline_mode<synchronous>, transform_indices = @transform_2, window_bounds = array<i64: 32, 1>}, {pipeline_mode = #tpu.pipeline_mode<synchronous>, transform_indices = @transform_3, window_bounds = array<i64: 32, 32>}, {pipeline_mode = #tpu.pipeline_mode<synchronous>, transform_indices = @transform_4, window_bounds = array<i64: 32, 1>}, {pipeline_mode = #tpu.pipeline_mode<synchronous>, transform_indices = @transform_5, window_bounds = array<i64: 32, 1>}, {pipeline_mode = #tpu.pipeline_mode<synchronous>, transform_indices = @transform_6, window_bounds = array<i64: 1, 1>}, {transform_indices = @transform_7, window_bounds = array<i64: 1, 128>}]} {
    %c0 = arith.constant 0 : index
    %c0_0 = arith.constant 0 : index
    %0 = vector.load %arg1[%c0, %c0_0] : memref<128x16xf32, #tpu.memory_space<vmem>>, vector<128x16xf32>
    %1 = arith.truncf %0 : vector<128x16xf32> to vector<128x16xbf16>
    %c0_1 = arith.constant 0 : index
    %c0_2 = arith.constant 0 : index
    %2 = vector.load %arg2[%c0_1, %c0_2] : memref<32x16xbf16, #tpu.memory_space<vmem>>, vector<32x16xbf16>
    %cst = arith.constant dense<0.000000e+00> : vector<32x128xf32>
    %3 = tpu.matmul %2, %1, %cst {dimension_numbers = #tpu.dot_dimension_numbers<[1], [1], [0], [0], [0, 0, 1, 0], [], []>} : vector<32x16xbf16>, vector<128x16xbf16>, vector<32x128xf32> -> vector<32x128xf32>
    %c0_3 = arith.constant 0 : index
    %c0_4 = arith.constant 0 : index
    %4 = vector.load %arg3[%c0_3, %c0_4] : memref<32x1xf32, #tpu.memory_space<vmem>>, vector<32x1xf32>
    %5 = vector.broadcast %4 : vector<32x1xf32> to vector<32x128xf32>
    %6 = arith.addf %3, %5 : vector<32x128xf32>
    %cst_5 = arith.constant 0.000000e+00 : f32
    %7 = vector.broadcast %cst_5 : f32 to vector<32x128xf32>
    %8 = arith.maximumf %6, %7 : vector<32x128xf32>
    %c0_6 = arith.constant 0 : index
    %c0_7 = arith.constant 0 : index
    %9 = vector.load %arg4[%c0_6, %c0_7] : memref<32x32xbf16, #tpu.memory_space<vmem>>, vector<32x32xbf16>
    %10 = arith.truncf %8 : vector<32x128xf32> to vector<32x128xbf16>
    %cst_8 = arith.constant dense<0.000000e+00> : vector<32x128xf32>
    %11 = tpu.matmul %9, %10, %cst_8 {dimension_numbers = #tpu.dot_dimension_numbers<[1], [0], [0], [1], [0, 0, 1, 1], [], []>} : vector<32x32xbf16>, vector<32x128xbf16>, vector<32x128xf32> -> vector<32x128xf32>
    %c0_9 = arith.constant 0 : index
    %c0_10 = arith.constant 0 : index
    %12 = vector.load %arg5[%c0_9, %c0_10] : memref<32x1xf32, #tpu.memory_space<vmem>>, vector<32x1xf32>
    %13 = vector.broadcast %12 : vector<32x1xf32> to vector<32x128xf32>
    %14 = arith.addf %11, %13 : vector<32x128xf32>
    %cst_11 = arith.constant 0.000000e+00 : f32
    %15 = vector.broadcast %cst_11 : f32 to vector<32x128xf32>
    %16 = arith.maximumf %14, %15 : vector<32x128xf32>
    %c0_12 = arith.constant 0 : index
    %c0_13 = arith.constant 0 : index
    %17 = vector.load %arg6[%c0_12, %c0_13] : memref<32x1xf32, #tpu.memory_space<vmem>>, vector<32x1xf32>
    %18 = vector.broadcast %17 : vector<32x1xf32> to vector<32x128xf32>
    %19 = arith.mulf %16, %18 : vector<32x128xf32>
    %cst_14 = arith.constant dense<0.000000e+00> : vector<128xf32>
    %20 = vector.multi_reduction <add>, %19, %cst_14 [0] : vector<32x128xf32> to vector<128xf32>
    %21 = vector.shape_cast %20 : vector<128xf32> to vector<1x128xf32>
    %c0_15 = arith.constant 0 : index
    %c0_16 = arith.constant 0 : index
    %22 = vector.load %arg7[%c0_15, %c0_16] : memref<1x1xf32, #tpu.memory_space<vmem>>, vector<1x1xf32>
    %23 = vector.broadcast %22 : vector<1x1xf32> to vector<1x128xf32>
    %24 = arith.addf %21, %23 : vector<1x128xf32>
    %25 = math.tanh %24 : vector<1x128xf32>
    %c0_17 = arith.constant 0 : index
    %c0_18 = arith.constant 0 : index
    %26 = vector.load %arg8[%c0_17, %c0_18] : memref<1x128xf32, #tpu.memory_space<vmem>>, vector<1x128xf32>
    tpu.vector_store %arg8[%c0_17, %c0_18], %25 {strides = array<i32>} : memref<1x128xf32, #tpu.memory_space<vmem>>, vector<1x128xf32>,
    return
  }
  func.func @transform_0(%arg0: i32) -> (i32, i32) {
    %c0_i32 = arith.constant 0 : i32
    %c0_i32_0 = arith.constant 0 : i32
    return %arg0, %c0_i32 : i32, i32
  }
  func.func @transform_1(%arg0: i32) -> (i32, i32) {
    %c0_i32 = arith.constant 0 : i32
    %c0_i32_0 = arith.constant 0 : i32
    %c0_i32_1 = arith.constant 0 : i32
    return %c0_i32, %c0_i32_0 : i32, i32
  }
  func.func @transform_2(%arg0: i32) -> (i32, i32) {
    %c0_i32 = arith.constant 0 : i32
    %c0_i32_0 = arith.constant 0 : i32
    %c0_i32_1 = arith.constant 0 : i32
    return %c0_i32, %c0_i32_0 : i32, i32
  }
  func.func @transform_3(%arg0: i32) -> (i32, i32) {
    %c0_i32 = arith.constant 0 : i32
    %c0_i32_0 = arith.constant 0 : i32
    %c0_i32_1 = arith.constant 0 : i32
    return %c0_i32, %c0_i32_0 : i32, i32
  }
  func.func @transform_4(%arg0: i32) -> (i32, i32) {
    %c0_i32 = arith.constant 0 : i32
    %c0_i32_0 = arith.constant 0 : i32
    %c0_i32_1 = arith.constant 0 : i32
    return %c0_i32, %c0_i32_0 : i32, i32
  }
  func.func @transform_5(%arg0: i32) -> (i32, i32) {
    %c0_i32 = arith.constant 0 : i32
    %c0_i32_0 = arith.constant 0 : i32
    %c0_i32_1 = arith.constant 0 : i32
    return %c0_i32, %c0_i32_0 : i32, i32
  }
  func.func @transform_6(%arg0: i32) -> (i32, i32) {
    %c0_i32 = arith.constant 0 : i32
    %c0_i32_0 = arith.constant 0 : i32
    %c0_i32_1 = arith.constant 0 : i32
    return %c0_i32, %c0_i32_0 : i32, i32
  }
  func.func @transform_7(%arg0: i32) -> (i32, i32) {
    %c0_i32 = arith.constant 0 : i32
    %c0_i32_0 = arith.constant 0 : i32
    return %c0_i32, %arg0 : i32, i32
  }
}

</mosaic_0001>

<llo_original>
// kernel: tpu_custom_call.1
$region0: #{tpu_custom_call.1}
  #allocation0 [shape = 'u32[]', space=smem, size = 0x4, offset = 0x4, fixed_abs, tag = 'smem constant byte address 0x4 - core index']
  #allocation1 [shape = 'u32[144,128]{1,0:T(1,128)}', space=vmem, size = 0x12000, scoped, tag = 'internal scratch']
  #allocation2 [shape = 'f32[1,1]{1,0:T(1,128)S(1)}', space=vmem, size = 0x200, scoped, tag = 'scoped memory for tpu_custom_call.1']
  %s0 = inlined_call_operand.vmem [shape: f32[64,16], index: 0, kind: input, shape index: {}]
  %s1 = inlined_call_operand.vmem [shape: bf16[32,16], index: 1, kind: input, shape index: {}]
  %s2 = inlined_call_operand.vmem [shape: f32[32,1], index: 2, kind: input, shape index: {}]
  %s3 = inlined_call_operand.vmem [shape: bf16[32,32], index: 3, kind: input, shape index: {}]
  %s4 = inlined_call_operand.vmem [shape: f32[32,1], index: 4, kind: input, shape index: {}]
  %s5 = inlined_call_operand.vmem [shape: f32[32,1], index: 5, kind: input, shape index: {}]
  %s6 = inlined_call_operand.<no memory space> [shape: f32[1,1], index: 6, kind: input, shape index: {}]
  %s7 = inlined_call_operand.hbm [shape: f32[1,128], index: 7, kind: output, shape index: {}]
  %s8 = sld [smem:[#allocation0]]
  $region38: #{tpu_custom_call.1} parent=0
    _
  %s10 = ssub.s32 1, %s8
  %s11 = scalar_select 0, %s10, %s8
  %v12 = vstv %s6
  %13 = vst [vmem:[#allocation2] sm:$0x1] %v12
  $region1: #{tpu_custom_call.1} parent=0
    #allocation3 [shape = 'u8[512]{0}', space=vmem, size = 0x400, scoped, tag = 'output window, operand 0, single buffered']
    #allocation4 [shape = 's32[1]{0}', space=sflag, size = 0x4, scoped, tag = 'scoped memory for tpu_custom_call.1']
    %14 = vsyncpa [#allocation4], 0
    // Predicated region
    $region2: #{tpu_custom_call.1} parent=1 // pred_check
      _
    $region3: #{tpu_custom_call.1} parent=1 // pred_check_branch
      %16 = sbr.rel (0) target = $region5
    $region4: #{tpu_custom_call.1} parent=1 // pred_region
      _
    $region5: #{tpu_custom_call.1} parent=1 // pred_fallthru
      _
    // Predicated region
    $region6: #{tpu_custom_call.1} parent=1 // pred_check
      _
    $region7: #{tpu_custom_call.1} parent=1 // pred_check_branch
      %18 = sbr.rel (0) target = $region9
    $region8: #{tpu_custom_call.1} parent=1 // pred_region
      _
    $region9: #{tpu_custom_call.1} parent=1 // pred_fallthru
      _
    // Predicated region
    $region10: #{tpu_custom_call.1} parent=1 // pred_check
      _
    $region11: #{tpu_custom_call.1} parent=1 // pred_check_branch
      %20 = sbr.rel (0) target = $region13
    $region12: #{tpu_custom_call.1} parent=1 // pred_region
      _
    $region13: #{tpu_custom_call.1} parent=1 // pred_fallthru
      _
    // Predicated region
    $region14: #{tpu_custom_call.1} parent=1 // pred_check
      _
    $region15: #{tpu_custom_call.1} parent=1 // pred_check_branch
      %22 = sbr.rel (0) target = $region17
    $region16: #{tpu_custom_call.1} parent=1 // pred_region
      _
    $region17: #{tpu_custom_call.1} parent=1 // pred_fallthru
      _
    // Predicated region
    $region18: #{tpu_custom_call.1} parent=1 // pred_check
      _
    $region19: #{tpu_custom_call.1} parent=1 // pred_check_branch
      %24 = sbr.rel (0) target = $region21
    $region20: #{tpu_custom_call.1} parent=1 // pred_region
      _
    $region21: #{tpu_custom_call.1} parent=1 // pred_fallthru
      _
    // Predicated region
    $region22: #{tpu_custom_call.1} parent=1 // pred_check
      _
    $region23: #{tpu_custom_call.1} parent=1 // pred_check_branch
      %26 = sbr.rel (0) target = $region25
    $region24: #{tpu_custom_call.1} parent=1 // pred_region
      _
    $region25: #{tpu_custom_call.1} parent=1 // pred_fallthru
      _
    // Predicated region
    $region26: #{tpu_custom_call.1} parent=1 // pred_check
      _
    $region27: #{tpu_custom_call.1} parent=1 // pred_check_branch
      %28 = sbr.rel (0) target = $region29
    $region28: #{tpu_custom_call.1} parent=1 // pred_region
      _
    $region29: #{tpu_custom_call.1} parent=1 // pred_fallthru
      _
    %v30 = vld [vmem:[%s0] sm:$0xff]
    %v31 = vld [vmem:[%s0 + $0x8] sm:$0xff]
    %v32 = vld [vmem:[%s0 + $0x10] sm:$0xff]
    %v33 = vld [vmem:[%s0 + $0x18] sm:$0xff]
    %v34 = vld [vmem:[%s0 + $0x20] sm:$0xff]
    %v35 = vld [vmem:[%s0 + $0x28] sm:$0xff]
    %v36 = vld [vmem:[%s0 + $0x30] sm:$0xff]
    %v37 = vld [vmem:[%s0 + $0x38] sm:$0xff]
    %v38 = vld [vmem:[%s0 + $0x40] sm:$0xff]
    %v39 = vld [vmem:[%s0 + $0x48] sm:$0xff]
    %v40 = vld [vmem:[%s0 + $0x50] sm:$0xff]
    %v41 = vld [vmem:[%s0 + $0x58] sm:$0xff]
    %v42 = vld [vmem:[%s0 + $0x60] sm:$0xff]
    %v43 = vld [vmem:[%s0 + $0x68] sm:$0xff]
    %v44 = vld [vmem:[%s0 + $0x70] sm:$0xff]
    %v45 = vld [vmem:[%s0 + $0x78] sm:$0xff]
    %v46 = vpack.c.bf16 %v31, %v30
    %v47 = vpack.c.bf16 %v33, %v32
    %v48 = vpack.c.bf16 %v35, %v34
    %v49 = vpack.c.bf16 %v37, %v36
    %v50 = vpack.c.bf16 %v39, %v38
    %v51 = vpack.c.bf16 %v41, %v40
    %v52 = vpack.c.bf16 %v43, %v42
    %v53 = vpack.c.bf16 %v45, %v44
    %v54 = vld [vmem:[%s1] sm:$0xf]
    %v55 = vld [vmem:[%s1 + $0x4] sm:$0xf]
    %v56 = vld [vmem:[%s1 + $0x8] sm:$0xf]
    %v57 = vld [vmem:[%s1 + $0xc] sm:$0xf]
    %v58 = vld [vmem:[%s2] sm:$0xff]
    %v59 = vld [vmem:[%s2 + $0x8] sm:$0xff]
    %v60 = vld [vmem:[%s2 + $0x10] sm:$0xff]
    %v61 = vld [vmem:[%s2 + $0x18] sm:$0xff]
    %63 = vset.pattern.permute.xlu0 0
    %64 = vperm.xlu0 %63, %v58
    %v65 = vpop.permute.xlu0 %64
    %68 = vset.pattern.permute.xlu0 0
    %69 = vperm.xlu0 %68, %v59
    %v70 = vpop.permute.xlu0 %69
    %73 = vset.pattern.permute.xlu0 0
    %74 = vperm.xlu0 %73, %v60
    %v75 = vpop.permute.xlu0 %74
    %78 = vset.pattern.permute.xlu0 0
    %79 = vperm.xlu0 %78, %v61
    %v80 = vpop.permute.xlu0 %79
    %v86 = vunpack.c.l.b16 %v54
    %v87 = vunpack.c.l.b16 %v55
    %v88 = vunpack.c.l.b16 %v56
    %v89 = vunpack.c.l.b16 %v57
    %v90 = vpack.c.b16 %v87, %v86
    %v91 = vpack.c.b16 %v89, %v88
    %vm92 = vcmask 130048
    %v94 = vsel %vm92, %v90, 0
    %v97 = vsel %vm92, %v91, 0
    %v100 = vsel %vm92, %v46, 0
    %v103 = vsel %vm92, %v47, 0
    %v106 = vsel %vm92, %v48, 0
    %v109 = vsel %vm92, %v49, 0
    %v112 = vsel %vm92, %v50, 0
    %v115 = vsel %vm92, %v51, 0
    %v118 = vsel %vm92, %v52, 0
    %v121 = vsel %vm92, %v53, 0
    %123 = vmatprep.subr.bf16.mxu0 0
    %124 = vmatpush1.bf16.xpose.msra.mxu0 %v121
    %125 = vmatprep.subr.bf16.mxu0 0
    %126 = vmatpush1.bf16.xpose.msra.mxu0 %v118
    %127 = vmatprep.subr.bf16.mxu0 0
    %128 = vmatpush1.bf16.xpose.msra.mxu0 %v115
    %129 = vmatprep.subr.bf16.mxu0 0
    %130 = vmatpush1.bf16.xpose.msra.mxu0 %v112
    %131 = vmatprep.subr.bf16.mxu0 0
    %132 = vmatpush1.bf16.xpose.msra.mxu0 %v109
    %133 = vmatprep.subr.bf16.mxu0 0
    %134 = vmatpush1.bf16.xpose.msra.mxu0 %v106
    %135 = vmatprep.subr.bf16.mxu0 0
    %136 = vmatpush1.bf16.xpose.msra.mxu0 %v103
    %137 = vmatprep.subr.bf16.mxu0 0
    %138 = vmatpush1.bf16.xpose.msra.mxu0 %v100
    %139 = vmatprep.subr.bf16.mxu0 0
    %140 = vmatpush2.bf16.xpose.msra.mxu0 0
    %141 = vmatprep.subr.bf16.mxu0 0
    %142 = vmatpush2.bf16.xpose.msra.mxu0 0
    %143 = vmatprep.subr.bf16.mxu0 0
    %144 = vmatpush2.bf16.xpose.msra.mxu0 0
    %145 = vmatprep.subr.bf16.mxu0 0
    %146 = vmatpush2.bf16.xpose.msra.mxu0 0
    %147 = vmatprep.subr.bf16.mxu0 0
    %148 = vmatpush2.bf16.xpose.msra.mxu0 0
    %149 = vmatprep.subr.bf16.mxu0 0
    %150 = vmatpush2.bf16.xpose.msra.mxu0 0
    %151 = vmatprep.subr.bf16.mxu0 0
    %152 = vmatpush2.bf16.xpose.msra.mxu0 0
    %153 = vmatprep.subr.bf16.mxu0 0
    %154 = vmatpush2.bf16.xpose.msra.mxu0 0
    %155 = vmatprep.mubr.bf16.mxu0 0
    %156 = vmatmul.mubr.bf16.gmra.mxu0 %v94
    %v157 = vpop.f32.mrf.mxu0
    %v158 = vadd.f32 %v65, %v157
    %v159 = vpop.f32.mrf.mxu0
    %v160 = vpop.f32.mrf.mxu0
    %v161 = vadd.f32 %v70, %v160
    %v162 = vpop.f32.mrf.mxu0
    %163 = vmatprep.mubr.bf16.mxu0 0
    %164 = vmatmul.mubr.bf16.gmra.mxu0 %v97
    %v165 = vpop.f32.mrf.mxu0
    %v166 = vadd.f32 %v75, %v165
    %v167 = vpop.f32.mrf.mxu0
    %v168 = vpop.f32.mrf.mxu0
    %v169 = vadd.f32 %v80, %v168
    %v170 = vpop.f32.mrf.mxu0
    %171 = vdwg.mxu0
    %v172 = vmax.f32 %v158, 0.0
    %v173 = vmax.f32 %v161, 0.0
    %v174 = vmax.f32 %v166, 0.0
    %v175 = vmax.f32 %v169, 0.0
    %v176 = vld [vmem:[%s3] sm:$0xf]
    %v177 = vld [vmem:[%s3 + $0x4] sm:$0xf]
    %v178 = vld [vmem:[%s3 + $0x8] sm:$0xf]
    %v179 = vld [vmem:[%s3 + $0xc] sm:$0xf]
    %v180 = vpack.c.bf16 %v173, %v172
    %v181 = vpack.c.bf16 %v175, %v174
    %v182 = vld [vmem:[%s4] sm:$0xff]
    %v183 = vld [vmem:[%s4 + $0x8] sm:$0xff]
    %v184 = vld [vmem:[%s4 + $0x10] sm:$0xff]
    %v185 = vld [vmem:[%s4 + $0x18] sm:$0xff]
    %187 = vset.pattern.permute.xlu0 0
    %188 = vperm.xlu0 %187, %v182
    %v189 = vpop.permute.xlu0 %188
    %192 = vset.pattern.permute.xlu0 0
    %193 = vperm.xlu0 %192, %v183
    %v194 = vpop.permute.xlu0 %193
    %197 = vset.pattern.permute.xlu0 0
    %198 = vperm.xlu0 %197, %v184
    %v199 = vpop.permute.xlu0 %198
    %202 = vset.pattern.permute.xlu0 0
    %203 = vperm.xlu0 %202, %v185
    %v204 = vpop.permute.xlu0 %203
    %v210 = vunpack.c.l.b16 %v176
    %v211 = vunpack.c.l.b16 %v177
    %v212 = vunpack.c.l.b16 %v178
    %v213 = vunpack.c.l.b16 %v179
    %v214 = vpack.c.b16 %v211, %v210
    %v215 = vpack.c.b16 %v213, %v212
    %vm216 = vcmask 261120
    %v218 = vsel %vm216, %v214, 0
    %v221 = vsel %vm216, %v215, 0
    %223 = vmatprep.subr.bf16.mxu0 0
    %224 = vmatpush1.bf16.msra.mxu0 0
    %225 = vmatprep.subr.bf16.mxu0 0
    %226 = vmatpush1.bf16.msra.mxu0 0
    %227 = vmatprep.subr.bf16.mxu0 0
    %228 = vmatpush1.bf16.msra.mxu0 0
    %229 = vmatprep.subr.bf16.mxu0 0
    %230 = vmatpush1.bf16.msra.mxu0 0
    %231 = vmatprep.subr.bf16.mxu0 0
    %232 = vmatpush1.bf16.msra.mxu0 0
    %233 = vmatprep.subr.bf16.mxu0 0
    %234 = vmatpush1.bf16.msra.mxu0 0
    %235 = vmatprep.subr.bf16.mxu0 0
    %236 = vmatpush1.bf16.msra.mxu0 %v181
    %237 = vmatprep.subr.bf16.mxu0 0
    %238 = vmatpush1.bf16.msra.mxu0 %v180
    %239 = vmatprep.subr.bf16.mxu0 0
    %240 = vmatpush2.bf16.msra.mxu0 0
    %241 = vmatprep.subr.bf16.mxu0 0
    %242 = vmatpush2.bf16.msra.mxu0 0
    %243 = vmatprep.subr.bf16.mxu0 0
    %244 = vmatpush2.bf16.msra.mxu0 0
    %245 = vmatprep.subr.bf16.mxu0 0
    %246 = vmatpush2.bf16.msra.mxu0 0
    %247 = vmatprep.subr.bf16.mxu0 0
    %248 = vmatpush2.bf16.msra.mxu0 0
    %249 = vmatprep.subr.bf16.mxu0 0
    %250 = vmatpush2.bf16.msra.mxu0 0
    %251 = vmatprep.subr.bf16.mxu0 0
    %252 = vmatpush2.bf16.msra.mxu0 0
    %253 = vmatprep.subr.bf16.mxu0 0
    %254 = vmatpush2.bf16.msra.mxu0 0
    %255 = vmatprep.mubr.bf16.mxu0 0
    %256 = vmatmul.mubr.bf16.gmra.mxu0 %v218
    %v257 = vpop.f32.mrf.mxu0
    %v258 = vadd.f32 %v189, %v257
    %v259 = vpop.f32.mrf.mxu0
    %v260 = vpop.f32.mrf.mxu0
    %v261 = vadd.f32 %v194, %v260
    %v262 = vpop.f32.mrf.mxu0
    %263 = vmatprep.mubr.bf16.mxu0 0
    %264 = vmatmul.mubr.bf16.gmra.mxu0 %v221
    %v265 = vpop.f32.mrf.mxu0
    %v266 = vadd.f32 %v199, %v265
    %v267 = vpop.f32.mrf.mxu0
    %v268 = vpop.f32.mrf.mxu0
    %v269 = vadd.f32 %v204, %v268
    %v270 = vpop.f32.mrf.mxu0
    %271 = vdwg.mxu0
    %v272 = vmax.f32 %v258, 0.0
    %v273 = vmax.f32 %v261, 0.0
    %v274 = vmax.f32 %v266, 0.0
    %v275 = vmax.f32 %v269, 0.0
    %v276 = vld [vmem:[%s5] sm:$0xff]
    %v277 = vld [vmem:[%s5 + $0x8] sm:$0xff]
    %v278 = vld [vmem:[%s5 + $0x10] sm:$0xff]
    %v279 = vld [vmem:[%s5 + $0x18] sm:$0xff]
    %281 = vset.pattern.permute.xlu0 0
    %282 = vperm.xlu0 %281, %v276
    %v283 = vpop.permute.xlu0 %282
    %286 = vset.pattern.permute.xlu0 0
    %287 = vperm.xlu0 %286, %v277
    %v288 = vpop.permute.xlu0 %287
    %291 = vset.pattern.permute.xlu0 0
    %292 = vperm.xlu0 %291, %v278
    %v293 = vpop.permute.xlu0 %292
    %296 = vset.pattern.permute.xlu0 0
    %297 = vperm.xlu0 %296, %v279
    %v298 = vpop.permute.xlu0 %297
    %v300 = vmul.f32 %v272, %v283
    %v301 = vmul.f32 %v273, %v288
    %v302 = vmul.f32 %v274, %v293
    %v303 = vmul.f32 %v275, %v298
    %v304 = vadd.f32 %v300, %v301
    %v305 = vadd.f32 %v304, %v302
    %v306 = vadd.f32 %v305, %v303
    %v307 = vrot.slane %v306, 4
    %v308 = vadd.f32 %v306, %v307
    %v309 = vrot.slane %v308, 2
    %v310 = vadd.f32 %v308, %v309
    %v311 = vrot.slane %v310, 1
    %v312 = vadd.f32 %v310, %v311
    %v313 = vld [vmem:[#allocation2] sm:$0x1]
    %315 = vset.pattern.permute.xlu0 0
    %316 = vperm.xlu0 %315, %v313
    %v317 = vpop.permute.xlu0 %316
    %v319 = vlaneseq
    %v320 = vshrl.u32 %v319, 7
    %v321 = vsub.s32 0, %v320
    %v322 = vrot.slane %v317, %v321
    %v323 = vadd.f32 %v312, %v322
    %v324 = vtanh.pop %v323
    %325 = vst [vmem:[#allocation3] sm:$0x1] %v324
    // Predicated region
    $region30: #{tpu_custom_call.1} parent=1 // pred_check
      _
    $region31: #{tpu_custom_call.1} parent=1 // pred_check_branch
      %327 = sbr.rel (0) target = $region33
    $region32: #{tpu_custom_call.1} parent=1 // pred_region
      %s329 = ssub.s32 16, 16
      %330 = vsyncadd [#allocation4], %s329
      %s332 = sshll.u32 [#allocation3], 4
      %s333 = int_to_ptr.vmem [resolvable:$true] %s332
      %335 = dma.vmem_to_hbm [thread:$0]  %s333, 16, %s7, [#allocation4]
    $region33: #{tpu_custom_call.1} parent=1 // pred_fallthru
      _
    // Predicated region
    $region34: #{tpu_custom_call.1} parent=1 // pred_check
      _
    $region35: #{tpu_custom_call.1} parent=1 // pred_check_branch
      %337 = sbr.rel (0) target = $region37
    $region36: #{tpu_custom_call.1} parent=1 // pred_region
      %338 = dma.done [#allocation4], 16
    $region37: #{tpu_custom_call.1} parent=1 // pred_fallthru
      _
    %339 = vsyncpa [#allocation4], 1

</llo_original>
